<compile_context>
chip_gen: v7x
topology: tpu7x:2x2x1
jax: 0.10.0
libtpu: 0.0.40
codegen_flags: <defaults>
</compile_context>

<pallas_src>
import functools

import jax
import jax.numpy as jnp
from jax import lax
from jax.experimental import pallas as pl
from jax.experimental.pallas import tpu as pltpu


def _conv_bias_prelu_kernel(alpha_ref, w_ref, p_ref, b_ref, o_ref):
    # alpha_ref : (1,)       f32 in SMEM   PReLU slope
    # w_ref     : (Cout, K)  bf16          folded conv weights
    # p_ref     : (K, MT)    bf16          im2col patch tile (MT pixels)
    # b_ref     : (Cout, 1)  f32           bias
    # o_ref     : (Cout, MT)               conv+bias+PReLU output tile
    acc = jnp.dot(w_ref[...], p_ref[...], preferred_element_type=jnp.float32)
    acc = acc + b_ref[...]                       # broadcast along lanes (pixels)
    alpha = alpha_ref[0]
    out = jnp.where(acc > 0.0, acc, alpha * acc)  # f32 epilogue on the accumulator
    o_ref[...] = out.astype(o_ref.dtype)


def _pick_m_tile(m_total, cout):
    """Tile size along the flattened N*H*W pixel (lane) axis.

    Multiple of 128 (unmasked stores), divides m_total, and keeps the f32
    result tile (Cout x MT) within ~256 KiB so it does not blow the vreg file.
    """
    cands = [t for t in range(128, m_total, 128) if m_total % t == 0]
    if not cands:
        return m_total
    fit = [t for t in cands if cout * t * 4 <= 256 * 1024]
    return max(fit) if fit else min(cands)


@functools.partial(jax.jit, static_argnames=("scaling_factor",))
def subpixel_conv_block(x_nchw, weight_oihw, bias, alpha, *, scaling_factor=2):
    """Forward pass matching PyTorch SubPixelConvolutionalBlock.

    x_nchw      : (N, Cin, H, W)
    weight_oihw : (Cout, Cin, KH, KW)  with Cout = Cin * scaling_factor**2
    bias        : (Cout,)
    alpha       : scalar PReLU weight
    returns     : (N, Cin, H*r, W*r)
    """
    N, Cin, H, W = x_nchw.shape
    Cout, _, KH, KW = weight_oihw.shape
    r = scaling_factor
    pad = KH // 2           # PyTorch 'same' behavior (odd kernel sizes)
    K = KH * KW * Cin
    M = N * H * W

    # ---- glue: im2col in (K, M) orientation, bf16 operands (single XLA fusion) ----
    xb = x_nchw.astype(jnp.bfloat16)
    x_pad = jnp.pad(xb, ((0, 0), (0, 0), (pad, pad), (pad, pad)))
    taps = [x_pad[:, :, kh:kh + H, kw:kw + W]       # each (N, Cin, H, W)
            for kh in range(KH) for kw in range(KW)]
    p = jnp.stack(taps, axis=0)                     # (KH*KW, N, Cin, H, W)
    p = jnp.transpose(p, (0, 2, 1, 3, 4))           # (KH*KW, Cin, N, H, W)
    patches = p.reshape(K, M)                       # K index = (kh, kw, ci)

    w_ck = jnp.transpose(weight_oihw, (0, 2, 3, 1)).reshape(Cout, K)
    w_ck = w_ck.astype(jnp.bfloat16)
    b2 = bias.astype(jnp.float32).reshape(Cout, 1)
    alpha1 = jnp.asarray(alpha, jnp.float32).reshape(1)

    MT = _pick_m_tile(M, Cout)
    grid = (M // MT,)

    conv = pl.pallas_call(
        _conv_bias_prelu_kernel,
        out_shape=jax.ShapeDtypeStruct((Cout, M), x_nchw.dtype),
        grid_spec=pltpu.PrefetchScalarGridSpec(
            num_scalar_prefetch=0,
            grid=grid,
            in_specs=[
                pl.BlockSpec(memory_space=pltpu.MemorySpace.SMEM),   # alpha
                pl.BlockSpec((Cout, K), lambda m: (0, 0)),           # weights
                pl.BlockSpec((K, MT), lambda m: (0, m)),             # patches
                pl.BlockSpec((Cout, 1), lambda m: (0, 0)),           # bias
            ],
            out_specs=pl.BlockSpec((Cout, MT), lambda m: (0, m)),
        ),
        compiler_params=pltpu.CompilerParams(
            dimension_semantics=("parallel",),
            vmem_limit_bytes=32 * 1024 * 1024,
        ),
    )(alpha1, w_ck, patches, b2)

    # ---- glue: PixelShuffle + NCHW output in ONE fused transpose ----
    # conv[o, m] with o = c*r*r + i*r + j, m = (n*H + h)*W + w
    C = Cout // (r * r)
    y = conv.reshape(C, r, r, N, H, W)
    y = jnp.transpose(y, (3, 0, 4, 1, 5, 2))        # (N, C, H, r, W, r)
    return y.reshape(N, C, H * r, W * r)


def _reference(x_nchw, weight_oihw, bias, alpha, scaling_factor):
    """Pure-JAX f32 reference (conv -> pixel shuffle -> PReLU) for validation."""
    pad = weight_oihw.shape[2] // 2
    conv = lax.conv_general_dilated(
        x_nchw, weight_oihw,
        window_strides=(1, 1),
        padding=[(pad, pad), (pad, pad)],
        dimension_numbers=("NCHW", "OIHW", "NCHW"),
    ) + bias[None, :, None, None]
    N, Crr, H, W = conv.shape
    r = scaling_factor
    C = Crr // (r * r)
    y = conv.reshape(N, C, r, r, H, W)
    y = jnp.transpose(y, (0, 1, 4, 2, 5, 3)).reshape(N, C, H * r, W * r)
    return jnp.where(y > 0, y, alpha * y)


if __name__ == "__main__":
    # Small, module-consistent shapes: n_channels=8, kernel_size=3, scaling=2.
    N, n_channels, H, W = 2, 8, 16, 16
    kernel_size, scaling_factor = 3, 2
    Cout = n_channels * scaling_factor ** 2

    key = jax.random.PRNGKey(0)
    kx, kw_, kb = jax.random.split(key, 3)
    x = jax.random.normal(kx, (N, n_channels, H, W), jnp.float32)
    weight = jax.random.normal(kw_, (Cout, n_channels, kernel_size, kernel_size),
                               jnp.float32) * 0.1
    bias = jax.random.normal(kb, (Cout,), jnp.float32) * 0.1
    alpha = jnp.float32(0.25)   # nn.PReLU() default init

    out = subpixel_conv_block(x, weight, bias, alpha,
                              scaling_factor=scaling_factor)
    out = jax.block_until_ready(out)

    ref = _reference(x, weight, bias, alpha, scaling_factor)
    assert out.shape == (N, n_channels, H * scaling_factor, W * scaling_factor)
    # bf16 MXU operands with f32 accumulation -> loose-but-safe tolerance vs f32 ref.
    assert jnp.allclose(out, ref, atol=5e-2, rtol=5e-2), \
        float(jnp.max(jnp.abs(out - ref)))

    print("KERNEL_OK")
</pallas_src>

<mosaic_0001>
module attributes {stable_mosaic.version = 11 : i64} {
  func.func @_conv_bias_prelu_kernel(%arg0: i32, %arg1: memref<1xf32, #tpu.memory_space<smem>>, %arg2: memref<32x72xbf16, #tpu.memory_space<vmem>>, %arg3: memref<72x256xbf16, #tpu.memory_space<vmem>>, %arg4: memref<32x1xf32, #tpu.memory_space<vmem>>, %arg5: memref<32x256xf32, #tpu.memory_space<vmem>>) attributes {dimension_semantics = [#tpu.dimension_semantics<parallel>], iteration_bounds = array<i64: 2>, scalar_prefetch = 0 : i64, scratch_operands = 0 : i64, tpu.core_type = #tpu.core_type<tc>, window_params = [{transform_indices = @transform_0, window_bounds = array<i64: 1>}, {pipeline_mode = #tpu.pipeline_mode<synchronous>, transform_indices = @transform_1, window_bounds = array<i64: 32, 72>}, {transform_indices = @transform_2, window_bounds = array<i64: 72, 256>}, {pipeline_mode = #tpu.pipeline_mode<synchronous>, transform_indices = @transform_3, window_bounds = array<i64: 32, 1>}, {transform_indices = @transform_4, window_bounds = array<i64: 32, 256>}]} {
    %c0 = arith.constant 0 : index
    %c0_0 = arith.constant 0 : index
    %0 = vector.load %arg2[%c0, %c0_0] : memref<32x72xbf16, #tpu.memory_space<vmem>>, vector<32x72xbf16>
    %c0_1 = arith.constant 0 : index
    %c0_2 = arith.constant 0 : index
    %1 = vector.load %arg3[%c0_1, %c0_2] : memref<72x256xbf16, #tpu.memory_space<vmem>>, vector<72x256xbf16>
    %cst = arith.constant dense<0.000000e+00> : vector<32x256xf32>
    %2 = tpu.matmul %0, %1, %cst {dimension_numbers = #tpu.dot_dimension_numbers<[1], [0], [0], [1], [0, 0, 1, 1], [], []>} : vector<32x72xbf16>, vector<72x256xbf16>, vector<32x256xf32> -> vector<32x256xf32>
    %c0_3 = arith.constant 0 : index
    %c0_4 = arith.constant 0 : index
    %3 = vector.load %arg4[%c0_3, %c0_4] : memref<32x1xf32, #tpu.memory_space<vmem>>, vector<32x1xf32>
    %4 = vector.broadcast %3 : vector<32x1xf32> to vector<32x256xf32>
    %5 = arith.addf %2, %4 : vector<32x256xf32>
    %c0_5 = arith.constant 0 : index
    %6 = memref.load %arg1[%c0_5] : memref<1xf32, #tpu.memory_space<smem>>
    %cst_6 = arith.constant 0.000000e+00 : f32
    %7 = vector.broadcast %cst_6 : f32 to vector<32x256xf32>
    %8 = arith.cmpf ogt, %5, %7 : vector<32x256xf32>
    %9 = vector.broadcast %6 : f32 to vector<32x256xf32>
    %10 = arith.mulf %9, %5 : vector<32x256xf32>
    %11 = arith.select %8, %5, %10 : vector<32x256xi1>, vector<32x256xf32>
    %c0_7 = arith.constant 0 : index
    %c0_8 = arith.constant 0 : index
    %12 = vector.load %arg5[%c0_7, %c0_8] : memref<32x256xf32, #tpu.memory_space<vmem>>, vector<32x256xf32>
    tpu.vector_store %arg5[%c0_7, %c0_8], %11 {strides = array<i32>} : memref<32x256xf32, #tpu.memory_space<vmem>>, vector<32x256xf32>,
    return
  }
  func.func @transform_0(%arg0: i32) -> i32 {
    %c0_i32 = arith.constant 0 : i32
    %c0_i32_0 = arith.constant 0 : i32
    return %c0_i32 : i32
  }
  func.func @transform_1(%arg0: i32) -> (i32, i32) {
    %c0_i32 = arith.constant 0 : i32
    %c0_i32_0 = arith.constant 0 : i32
    %c0_i32_1 = arith.constant 0 : i32
    return %c0_i32, %c0_i32_0 : i32, i32
  }
  func.func @transform_2(%arg0: i32) -> (i32, i32) {
    %c0_i32 = arith.constant 0 : i32
    %c0_i32_0 = arith.constant 0 : i32
    return %c0_i32, %arg0 : i32, i32
  }
  func.func @transform_3(%arg0: i32) -> (i32, i32) {
    %c0_i32 = arith.constant 0 : i32
    %c0_i32_0 = arith.constant 0 : i32
    %c0_i32_1 = arith.constant 0 : i32
    return %c0_i32, %c0_i32_0 : i32, i32
  }
  func.func @transform_4(%arg0: i32) -> (i32, i32) {
    %c0_i32 = arith.constant 0 : i32
    %c0_i32_0 = arith.constant 0 : i32
    return %c0_i32, %arg0 : i32, i32
  }
}

</mosaic_0001>

<llo_original>
// kernel: subpixel_conv_block.1
$region0: #{subpixel_conv_block.1}
  #allocation0 [shape = 'u32[]', space=smem, size = 0x4, offset = 0x4, fixed_abs, tag = 'smem constant byte address 0x4 - core index']
  #allocation1 [shape = 'u32[144,128]{1,0:T(1,128)}', space=vmem, size = 0x12000, scoped, tag = 'internal scratch']
  #allocation2 [shape = 'f32[1]{0:T(128)S(6)}', space=smem, size = 0x200, scoped, tag = 'scoped memory for subpixel_conv_block.1']
  %s0 = inlined_call_operand.<no memory space> [shape: f32[1], index: 0, kind: input, shape index: {}]
  %s1 = inlined_call_operand.vmem [shape: bf16[32,72], index: 1, kind: input, shape index: {}]
  %s2 = inlined_call_operand.vmem [shape: bf16[72,512], index: 2, kind: input, shape index: {}]
  %s3 = inlined_call_operand.vmem [shape: f32[32,1], index: 3, kind: input, shape index: {}]
  %s4 = inlined_call_operand.vmem [shape: f32[32,512], index: 4, kind: output, shape index: {}]
  %s5 = sld [smem:[#allocation0]]
  $region106: #{subpixel_conv_block.1} parent=0
    _
  %s7 = ssub.s32 1, %s5
  %s8 = scalar_select 0, %s7, %s5
  %9 = sst [smem:[#allocation2]] %s0
  $region1: #{subpixel_conv_block.1} parent=0
    #allocation3 [shape = 'u8[73728]{0}', space=vmem, size = 0x12000, scoped, tag = 'input window, operand 2']
    #allocation4 [shape = 'u8[65536]{0}', space=vmem, size = 0x10000, scoped, tag = 'output window, operand 0']
    loop: start=0, step=1, limit=4
    $region2: #{subpixel_conv_block.1} parent=1 // loop_pre_header
      _
    $region3: #{subpixel_conv_block.1} parent=1 // loop_header
      %s11 = sphi 0, %s15
      %p12 = scmp.ge.s32.totalorder %s11, 4
      %s19 = sphi 0, %s19
      %s21 = sphi 0, %s19
      %s22 = sphi 0, %s21
      %s36 = sphi 0, %s22
      %s40 = sphi 0, %s40
      %s42 = sphi 0, %s40
      %s43 = sphi 0, %s42
      %s57 = sphi 0, %s43
      %s63 = sphi 0, %s65
      %s66 = sphi 0, %s63
      %s67 = sphi 0, %s66
      %s83 = sphi 0, %s67
      %s87 = sphi 0, %s87
      %s89 = sphi 0, %s87
      %s90 = sphi 0, %s89
      %s104 = sphi 0, %s90
      %s110 = sphi 0, %s112
      %s113 = sphi 0, %s110
      %s114 = sphi 0, %s113
      %s130 = sphi 0, %s114
    $region4: #{subpixel_conv_block.1} parent=1 // loop_header_branch
      %14 = sbr.rel (%p12) target = $region8
    $region5: #{subpixel_conv_block.1} parent=1 // loop_body
      %s16 = ssub.s32 %s11, 1
      %s17 = ssub.s32 %s11, 2
      %s18 = sadd.s32 %s11, 1
      %s20 = sadd.s32 %s19, 1
      %p23 = scmp.eq.s32.totalorder %s11, 1
      %p24 = scmp.ne.s32.totalorder %s19, %s21
      %p25 = scmp.eq.s32.totalorder %s11, 0
      %p26 = por %p24, %p25
      %p27 = scmp.ne.s32.totalorder %s19, %s21
      %p28 = scmp.eq.s32.totalorder %s16, 1
      %p29 = por %p27, %p28
      %p30 = scmp.ne.s32.totalorder %s21, %s22
      %p31 = scmp.eq.s32.totalorder %s16, 0
      %p32 = por %p30, %p31
      %p33 = scmp.ne.s32.totalorder %s21, %s22
      %p34 = scmp.eq.s32.totalorder %s17, 1
      %p35 = por %p33, %p34
      %p37 = scmp.ne.s32.totalorder %s22, %s36
      %p38 = scmp.eq.s32.totalorder %s17, 0
      %p39 = por %p37, %p38
      %s41 = sadd.s32 %s40, 1
      %p44 = scmp.eq.s32.totalorder %s11, 1
      %p45 = scmp.ne.s32.totalorder %s40, %s42
      %p46 = scmp.eq.s32.totalorder %s11, 0
      %p47 = por %p45, %p46
      %p48 = scmp.ne.s32.totalorder %s40, %s42
      %p49 = scmp.eq.s32.totalorder %s16, 1
      %p50 = por %p48, %p49
      %p51 = scmp.ne.s32.totalorder %s42, %s43
      %p52 = scmp.eq.s32.totalorder %s16, 0
      %p53 = por %p51, %p52
      %p54 = scmp.ne.s32.totalorder %s42, %s43
      %p55 = scmp.eq.s32.totalorder %s17, 1
      %p56 = por %p54, %p55
      %p58 = scmp.ne.s32.totalorder %s43, %s57
      %p59 = scmp.eq.s32.totalorder %s17, 0
      %p60 = por %p58, %p59
      %s61 = ssub.s32 %s11, %s18
      %p62 = scmp.eq.s32.totalorder %s61, 0
      %s64 = sadd.s32 %s63, 1
      %s65 = scalar_select %p62, %s63, %s64
      %p68 = pneg %p62
      %p69 = scmp.eq.s32.totalorder %s11, 1
      %p70 = por %p68, %p69
      %p71 = scmp.ne.s32.totalorder %s63, %s66
      %p72 = scmp.eq.s32.totalorder %s11, 0
      %p73 = por %p71, %p72
      %p74 = scmp.ne.s32.totalorder %s63, %s66
      %p75 = scmp.eq.s32.totalorder %s16, 1
      %p76 = por %p74, %p75
      %p77 = scmp.ne.s32.totalorder %s66, %s67
      %p78 = scmp.eq.s32.totalorder %s16, 0
      %p79 = por %p77, %p78
      %p80 = scmp.ne.s32.totalorder %s66, %s67
      %p81 = scmp.eq.s32.totalorder %s17, 1
      %p82 = por %p80, %p81
      %p84 = scmp.ne.s32.totalorder %s67, %s83
      %p85 = scmp.eq.s32.totalorder %s17, 0
      %p86 = por %p84, %p85
      %s88 = sadd.s32 %s87, 1
      %p91 = scmp.eq.s32.totalorder %s11, 1
      %p92 = scmp.ne.s32.totalorder %s87, %s89
      %p93 = scmp.eq.s32.totalorder %s11, 0
      %p94 = por %p92, %p93
      %p95 = scmp.ne.s32.totalorder %s87, %s89
      %p96 = scmp.eq.s32.totalorder %s16, 1
      %p97 = por %p95, %p96
      %p98 = scmp.ne.s32.totalorder %s89, %s90
      %p99 = scmp.eq.s32.totalorder %s16, 0
      %p100 = por %p98, %p99
      %p101 = scmp.ne.s32.totalorder %s89, %s90
      %p102 = scmp.eq.s32.totalorder %s17, 1
      %p103 = por %p101, %p102
      %p105 = scmp.ne.s32.totalorder %s90, %s104
      %p106 = scmp.eq.s32.totalorder %s17, 0
      %p107 = por %p105, %p106
      %s108 = ssub.s32 %s11, %s18
      %p109 = scmp.eq.s32.totalorder %s108, 0
      %s111 = sadd.s32 %s110, 1
      %s112 = scalar_select %p109, %s110, %s111
      %p115 = pneg %p109
      %p116 = scmp.eq.s32.totalorder %s11, 1
      %p117 = por %p115, %p116
      %p118 = scmp.ne.s32.totalorder %s110, %s113
      %p119 = scmp.eq.s32.totalorder %s11, 0
      %p120 = por %p118, %p119
      %p121 = scmp.ne.s32.totalorder %s110, %s113
      %p122 = scmp.eq.s32.totalorder %s16, 1
      %p123 = por %p121, %p122
      %p124 = scmp.ne.s32.totalorder %s113, %s114
      %p125 = scmp.eq.s32.totalorder %s16, 0
      %p126 = por %p124, %p125
      %p127 = scmp.ne.s32.totalorder %s113, %s114
      %p128 = scmp.eq.s32.totalorder %s17, 1
      %p129 = por %p127, %p128
      %p131 = scmp.ne.s32.totalorder %s114, %s130
      %p132 = scmp.eq.s32.totalorder %s17, 0
      %p133 = por %p131, %p132
      %p134 = scmp.le.s32.totalorder 1, %s11
      %p135 = scmp.lt.s32.totalorder %s11, 3
      %p136 = pnand %p134, %p135
      %p137 = pneg %p136
      // Predicated region
      $region9: #{subpixel_conv_block.1} parent=5 // pred_check
        _
      $region10: #{subpixel_conv_block.1} parent=5 // pred_check_branch
        %139 = sbr.rel (%p136) target = $region12
      $region11: #{subpixel_conv_block.1} parent=5 // pred_region
        %s140 = ssub.s32 %s11, 1
        // Predicated region
        $region13: #{subpixel_conv_block.1} parent=11 // pred_check
          %p141 = pneg %p32
        $region14: #{subpixel_conv_block.1} parent=11 // pred_check_branch
          %143 = sbr.rel (%p141) target = $region16
        $region15: #{subpixel_conv_block.1} parent=11 // pred_region
          _
        $region16: #{subpixel_conv_block.1} parent=11 // pred_fallthru
          _
        // Predicated region
        $region17: #{subpixel_conv_block.1} parent=11 // pred_check
          %p144 = pneg %p53
        $region18: #{subpixel_conv_block.1} parent=11 // pred_check_branch
          %146 = sbr.rel (%p144) target = $region20
        $region19: #{subpixel_conv_block.1} parent=11 // pred_region
          _
        $region20: #{subpixel_conv_block.1} parent=11 // pred_fallthru
          _
        // Predicated region
        $region21: #{subpixel_conv_block.1} parent=11 // pred_check
          %p147 = pneg %p100
        $region22: #{subpixel_conv_block.1} parent=11 // pred_check_branch
          %149 = sbr.rel (%p147) target = $region24
        $region23: #{subpixel_conv_block.1} parent=11 // pred_region
          _
        $region24: #{subpixel_conv_block.1} parent=11 // pred_fallthru
          _
      $region12: #{subpixel_conv_block.1} parent=5 // pred_fallthru
        _
      %p150 = scmp.lt.s32.totalorder %s11, 2
      // Predicated region
      $region25: #{subpixel_conv_block.1} parent=5 // pred_check
        %p151 = pneg %p150
      $region26: #{subpixel_conv_block.1} parent=5 // pred_check_branch
        %153 = sbr.rel (%p151) target = $region28
      $region27: #{subpixel_conv_block.1} parent=5 // pred_region
        // Predicated region
        $region29: #{subpixel_conv_block.1} parent=27 // pred_check
          %p154 = pneg %p73
        $region30: #{subpixel_conv_block.1} parent=27 // pred_check_branch
          %156 = sbr.rel (%p154) target = $region32
        $region31: #{subpixel_conv_block.1} parent=27 // pred_region
          %s157 = sand.u32 %s63, 1
          %s158 = sand.u32 %s63, 1
          %s159 = smul.addr %s158, 72
          %s160 = scalar_lea.vmem [#allocation3], %s159
          %s161 = smul.u32 2, %s11
          %s162 = smul.addr %s161, 4
          %s163 = scalar_lea.vmem %s2, %s162
          // Predicated region
          $region33: #{subpixel_conv_block.1} parent=31 // pred_check
            _
          $region34: #{subpixel_conv_block.1} parent=31 // pred_check_branch
            %165 = sbr.rel (0) target = $region36
          $region35: #{subpixel_conv_block.1} parent=31 // pred_region
            // Predicated region
            $region37: #{subpixel_conv_block.1} parent=35 // pred_check
              _
            $region38: #{subpixel_conv_block.1} parent=35 // pred_check_branch
              %167 = sbr.rel (0) target = $region40
            $region39: #{subpixel_conv_block.1} parent=35 // pred_region
              // Predicated region
              $region52: #{subpixel_conv_block.1} parent=39 // pred_check
                _
              $region53: #{subpixel_conv_block.1} parent=39 // pred_check_branch
                %198 = sbr.rel (0) target = $region55
              $region54: #{subpixel_conv_block.1} parent=39 // pred_region
                loop: start=0, step=1, limit=1
                $region56: #{subpixel_conv_block.1} parent=54 // loop_pre_header
                  _
                $region57: #{subpixel_conv_block.1} parent=54 // loop_header
                  %s200 = sphi 0, %s204
                  %p201 = scmp.ge.s32.totalorder %s200, 1
                  %s205 = sphi %s163, %s163
                  %s206 = sphi %s160, %s160
                $region58: #{subpixel_conv_block.1} parent=54 // loop_header_branch
                  %203 = sbr.rel (%p201) target = $region62
                $region59: #{subpixel_conv_block.1} parent=54 // loop_body
                  %v207 = vld [vmem:[%s205] sm:$0xff]
                  %208 = vst [vmem:[%s206] sm:$0xff] %v207
                  %v209 = vld [vmem:[%s205 + $0x10] sm:$0xff]
                  %210 = vst [vmem:[%s206 + $0x8] sm:$0xff] %v209
                  %v211 = vld [vmem:[%s205 + $0x20] sm:$0xff]
                  %212 = vst [vmem:[%s206 + $0x10] sm:$0xff] %v211
                  %v213 = vld [vmem:[%s205 + $0x30] sm:$0xff]
                  %214 = vst [vmem:[%s206 + $0x18] sm:$0xff] %v213
                  %v215 = vld [vmem:[%s205 + $0x40] sm:$0xff]
                  %216 = vst [vmem:[%s206 + $0x20] sm:$0xff] %v215
                  %v217 = vld [vmem:[%s205 + $0x50] sm:$0xff]
                  %218 = vst [vmem:[%s206 + $0x28] sm:$0xff] %v217
                  %v219 = vld [vmem:[%s205 + $0x60] sm:$0xff]
                  %220 = vst [vmem:[%s206 + $0x30] sm:$0xff] %v219
                  %v221 = vld [vmem:[%s205 + $0x70] sm:$0xff]
                  %222 = vst [vmem:[%s206 + $0x38] sm:$0xff] %v221
                  %v223 = vld [vmem:[%s205 + $0x80] sm:$0xff]
                  %224 = vst [vmem:[%s206 + $0x40] sm:$0xff] %v223
                $region60: #{subpixel_conv_block.1} parent=54 // loop_footer
                  %s204 = sadd.s32 1, %s200
                $region61: #{subpixel_conv_block.1} parent=54 // loop_footer_branch
                  %199 = sbr.rel target = $region57
                $region62: #{subpixel_conv_block.1} parent=54 // loop_exit
                  _
              $region55: #{subpixel_conv_block.1} parent=39 // pred_fallthru
                _
              // Predicated region
              $region63: #{subpixel_conv_block.1} parent=39 // pred_check
                _
              $region64: #{subpixel_conv_block.1} parent=39 // pred_check_branch
                %226 = sbr.rel target = $region66
              $region65: #{subpixel_conv_block.1} parent=39 // pred_region
                _
              $region66: #{subpixel_conv_block.1} parent=39 // pred_fallthru
                _
            $region40: #{subpixel_conv_block.1} parent=35 // pred_fallthru
              _
            // Predicated region
            $region41: #{subpixel_conv_block.1} parent=35 // pred_check
              _
            $region42: #{subpixel_conv_block.1} parent=35 // pred_check_branch
              %169 = sbr.rel target = $region44
            $region43: #{subpixel_conv_block.1} parent=35 // pred_region
              loop: start=0, step=1, limit=1
              $region45: #{subpixel_conv_block.1} parent=43 // loop_pre_header
                _
              $region46: #{subpixel_conv_block.1} parent=43 // loop_header
                %s172 = sphi 0, %s176
                %p173 = scmp.ge.s32.totalorder %s172, 1
                %s177 = sphi %s163, %s163
                %s178 = sphi %s160, %s160
              $region47: #{subpixel_conv_block.1} parent=43 // loop_header_branch
                %175 = sbr.rel (%p173) target = $region51
              $region48: #{subpixel_conv_block.1} parent=43 // loop_body
                %v179 = vld [vmem:[%s177] sm:$0xff]
                %180 = vst [vmem:[%s178] sm:$0xff] %v179
                %v181 = vld [vmem:[%s177 + $0x10] sm:$0xff]
                %182 = vst [vmem:[%s178 + $0x8] sm:$0xff] %v181
                %v183 = vld [vmem:[%s177 + $0x20] sm:$0xff]
                %184 = vst [vmem:[%s178 + $0x10] sm:$0xff] %v183
                %v185 = vld [vmem:[%s177 + $0x30] sm:$0xff]
                %186 = vst [vmem:[%s178 + $0x18] sm:$0xff] %v185
                %v187 = vld [vmem:[%s177 + $0x40] sm:$0xff]
                %188 = vst [vmem:[%s178 + $0x20] sm:$0xff] %v187
                %v189 = vld [vmem:[%s177 + $0x50] sm:$0xff]
                %190 = vst [vmem:[%s178 + $0x28] sm:$0xff] %v189
                %v191 = vld [vmem:[%s177 + $0x60] sm:$0xff]
                %192 = vst [vmem:[%s178 + $0x30] sm:$0xff] %v191
                %v193 = vld [vmem:[%s177 + $0x70] sm:$0xff]
                %194 = vst [vmem:[%s178 + $0x38] sm:$0xff] %v193
                %v195 = vld [vmem:[%s177 + $0x80] sm:$0xff]
                %196 = vst [vmem:[%s178 + $0x40] sm:$0xff] %v195
              $region49: #{subpixel_conv_block.1} parent=43 // loop_footer
                %s176 = sadd.s32 1, %s172
              $region50: #{subpixel_conv_block.1} parent=43 // loop_footer_branch
                %171 = sbr.rel target = $region46
              $region51: #{subpixel_conv_block.1} parent=43 // loop_exit
                _
            $region44: #{subpixel_conv_block.1} parent=35 // pred_fallthru
              _
          $region36: #{subpixel_conv_block.1} parent=31 // pred_fallthru
            _
          %227 = vnop
        $region32: #{subpixel_conv_block.1} parent=27 // pred_fallthru
          _
      $region28: #{subpixel_conv_block.1} parent=5 // pred_fallthru
        _
      %p228 = scmp.le.s32.totalorder 1, %s11
      %p229 = scmp.lt.s32.totalorder %s11, 3
      %p230 = pnand %p228, %p229
      %p231 = pneg %p230
      // Predicated region
      $region67: #{subpixel_conv_block.1} parent=5 // pred_check
        _
      $region68: #{subpixel_conv_block.1} parent=5 // pred_check_branch
        %233 = sbr.rel (%p230) target = $region70
      $region69: #{subpixel_conv_block.1} parent=5 // pred_region
        %s234 = ssub.s32 %s11, 1
        %s235 = sand.u32 %s66, 1
        %s236 = sand.u32 %s66, 1
        %s237 = smul.addr %s236, 72
        %s238 = scalar_lea.vmem [#allocation3], %s237
        // Predicated region
        $region71: #{subpixel_conv_block.1} parent=69 // pred_check
          %p239 = pneg %p79
        $region72: #{subpixel_conv_block.1} parent=69 // pred_check_branch
          %241 = sbr.rel (%p239) target = $region74
        $region73: #{subpixel_conv_block.1} parent=69 // pred_region
          _
        $region74: #{subpixel_conv_block.1} parent=69 // pred_fallthru
          _
        %p242 = pneg %p32
        %p243 = pneg %p29
        %p244 = pneg %p53
        %p245 = pneg %p50
        %s246 = sand.u32 %s66, 1
        %s247 = sand.u32 %s66, 1
        %s248 = smul.addr %s247, 72
        %s249 = scalar_lea.vmem [#allocation3], %s248
        %p250 = pneg %p79
        %p251 = pneg %p76
        %p252 = pneg %p100
        %p253 = pneg %p97
        %p254 = pneg %p126
        %p255 = pneg %p123
        %s256 = sand.u32 %s113, 1
        %s257 = sand.u32 %s113, 1
        %s258 = smul.addr %s257, 64
        %s259 = scalar_lea.vmem [#allocation4], %s258
        %s260 = smul.u32 2, %s16
        %s261 = smul.u32 2, %s16
        %v263 = vld [vmem:[%s1] sm:$0xf]
        %v264 = vld [vmem:[%s1 + $0x4] sm:$0xf]
        %v265 = vld [vmem:[%s1 + $0x8] sm:$0xf]
        %v266 = vld [vmem:[%s1 + $0xc] sm:$0xf]
        %v267 = vld [vmem:[%s238] sm:$0xff]
        %v268 = vld [vmem:[%s238 + $0x8] sm:$0xff]
        %v269 = vld [vmem:[%s238 + $0x10] sm:$0xff]
        %v270 = vld [vmem:[%s238 + $0x18] sm:$0xff]
        %v271 = vld [vmem:[%s238 + $0x20] sm:$0xff]
        %v272 = vld [vmem:[%s238 + $0x28] sm:$0xff]
        %v273 = vld [vmem:[%s238 + $0x30] sm:$0xff]
        %v274 = vld [vmem:[%s238 + $0x38] sm:$0xff]
        %v275 = vld [vmem:[%s238 + $0x40] sm:$0xff]
        %v276 = vld [vmem:[%s3] sm:$0xff]
        %v277 = vld [vmem:[%s3 + $0x8] sm:$0xff]
        %v278 = vld [vmem:[%s3 + $0x10] sm:$0xff]
        %v279 = vld [vmem:[%s3 + $0x18] sm:$0xff]
        %281 = vset.pattern.permute.xlu0 0
        %282 = vperm.xlu0 %281, %v276
        %v283 = vpop.permute.xlu0 %282
        %286 = vset.pattern.permute.xlu0 0
        %287 = vperm.xlu0 %286, %v277
        %v288 = vpop.permute.xlu0 %287
        %291 = vset.pattern.permute.xlu0 0
        %292 = vperm.xlu0 %291, %v278
        %v293 = vpop.permute.xlu0 %292
        %296 = vset.pattern.permute.xlu0 0
        %297 = vperm.xlu0 %296, %v279
        %v298 = vpop.permute.xlu0 %297
        %v304 = vunpack.c.l.b16 %v263
        %v305 = vunpack.c.l.b16 %v264
        %v306 = vunpack.c.l.b16 %v265
        %v307 = vunpack.c.l.b16 %v266
        %v308 = vpack.c.b16 %v305, %v304
        %v309 = vpack.c.b16 %v307, %v306
        %v319 = vunpack.c.l.b16 %v267
        %v320 = vunpack.c.h.b16 %v267
        %v321 = vunpack.c.l.b16 %v268
        %v322 = vunpack.c.h.b16 %v268
        %v323 = vunpack.c.l.b16 %v269
        %v324 = vunpack.c.h.b16 %v269
        %v325 = vunpack.c.l.b16 %v270
        %v326 = vunpack.c.h.b16 %v270
        %v327 = vunpack.c.l.b16 %v271
        %v328 = vunpack.c.h.b16 %v271
        %v329 = vunpack.c.l.b16 %v272
        %v330 = vunpack.c.h.b16 %v272
        %v331 = vunpack.c.l.b16 %v273
        %v332 = vunpack.c.h.b16 %v273
        %v333 = vunpack.c.l.b16 %v274
        %v334 = vunpack.c.h.b16 %v274
        %v335 = vunpack.c.l.b16 %v275
        %v336 = vunpack.c.h.b16 %v275
        %v337 = vpack.c.b16 %v321, %v319
        %v338 = vpack.c.b16 %v322, %v320
        %v339 = vpack.c.b16 %v325, %v323
        %v340 = vpack.c.b16 %v326, %v324
        %v341 = vpack.c.b16 %v329, %v327
        %v342 = vpack.c.b16 %v330, %v328
        %v343 = vpack.c.b16 %v333, %v331
        %v344 = vpack.c.b16 %v334, %v332
        %v345 = vpack.c.b16 %v335, %v335
        %v346 = vpack.c.b16 %v336, %v336
        %vm355 = vcmask 588800
        %v357 = vsel %vm355, %v308, 0
        %v360 = vsel %vm355, %v309, 0
        %vm362 = vcmask 1043456
        %v364 = vsel %vm362, %v345, 0
        %v367 = vsel %vm362, %v346, 0
        %369 = vmatprep.subr.bf16.mxu0 %v338
        %370 = vmatpush1.bf16.msra.mxu0 %v337
        %371 = vmatprep.subr.bf16.mxu0 %v340
        %372 = vmatpush1.bf16.msra.mxu0 %v339
        %373 = vmatprep.subr.bf16.mxu0 %v342
        %374 = vmatpush1.bf16.msra.mxu0 %v341
        %375 = vmatprep.subr.bf16.mxu0 %v344
        %376 = vmatpush1.bf16.msra.mxu0 %v343
        %377 = vmatprep.subr.bf16.mxu0 %v367
        %378 = vmatpush1.bf16.msra.mxu0 %v364
        %379 = vmatprep.subr.bf16.mxu0 0
        %380 = vmatpush1.bf16.msra.mxu0 0
        %381 = vmatprep.subr.bf16.mxu0 0
        %382 = vmatpush1.bf16.msra.mxu0 0
        %383 = vmatprep.subr.bf16.mxu0 0
        %384 = vmatpush1.bf16.msra.mxu0 0
        %385 = vmatprep.subr.bf16.mxu0 0
        %386 = vmatpush1.bf16.msra.mxu0 0
        %387 = vmatprep.subr.bf16.mxu0 0
        %388 = vmatpush1.bf16.msra.mxu0 0
        %389 = vmatprep.subr.bf16.mxu0 0
        %390 = vmatpush1.bf16.msra.mxu0 0
        %391 = vmatprep.subr.bf16.mxu0 0
        %392 = vmatpush1.bf16.msra.mxu0 0
        %393 = vmatprep.subr.bf16.mxu0 0
        %394 = vmatpush1.bf16.msra.mxu0 0
        %395 = vmatprep.subr.bf16.mxu0 0
        %396 = vmatpush1.bf16.msra.mxu0 0
        %397 = vmatprep.subr.bf16.mxu0 0
        %398 = vmatpush1.bf16.msra.mxu0 0
        %399 = vmatprep.subr.bf16.mxu0 0
        %400 = vmatpush1.bf16.msra.mxu0 0
        %401 = vmatprep.mubr.bf16.mxu0 0
        %402 = vmatmul.mubr.bf16.gmra.mrb[0].mxu0 %v357
        %v403 = vpop.f32.mrb[0].mxu0
        %v404 = vadd.f32 %v283, %v403
        %v405 = vpop.f32.mrb[0].mxu0
        %v406 = vadd.f32 %v283, %v405
        %v407 = vpop.f32.mrb[0].mxu0
        %v408 = vadd.f32 %v288, %v407
        %v409 = vpop.f32.mrb[0].mxu0
        %v410 = vadd.f32 %v288, %v409
        %411 = vmatprep.mubr.bf16.mxu0 0
        %412 = vmatmul.mubr.bf16.gmra.mrb[0].mxu0 %v360
        %v413 = vpop.f32.mrb[0].mxu0
        %v414 = vadd.f32 %v293, %v413
        %v415 = vpop.f32.mrb[0].mxu0
        %v416 = vadd.f32 %v293, %v415
        %v417 = vpop.f32.mrb[0].mxu0
        %v418 = vadd.f32 %v298, %v417
        %v419 = vpop.f32.mrb[0].mxu0
        %v420 = vadd.f32 %v298, %v419
        %421 = vdwg.mxu0
        %s422 = sld [smem:[#allocation2]]
        %vm423 = vcmp.gt.f32.partialorder %v404, 0.0
        %vm424 = vcmp.gt.f32.partialorder %v406, 0.0
        %vm425 = vcmp.gt.f32.partialorder %v408, 0.0
        %vm426 = vcmp.gt.f32.partialorder %v410, 0.0
        %vm427 = vcmp.gt.f32.partialorder %v414, 0.0
        %vm428 = vcmp.gt.f32.partialorder %v416, 0.0
        %vm429 = vcmp.gt.f32.partialorder %v418, 0.0
        %vm430 = vcmp.gt.f32.partialorder %v420, 0.0
        %v431 = vstv %s422
        %v432 = vmul.f32 %v431, %v404
        %v433 = vmul.f32 %v431, %v406
        %v434 = vmul.f32 %v431, %v408
        %v435 = vmul.f32 %v431, %v410
        %v436 = vmul.f32 %v431, %v414
        %v437 = vmul.f32 %v431, %v416
        %v438 = vmul.f32 %v431, %v418
        %v439 = vmul.f32 %v431, %v420
        %v440 = vsel %vm423, %v404, %v432
        %v441 = vsel %vm424, %v406, %v433
        %v442 = vsel %vm425, %v408, %v434
        %v443 = vsel %vm426, %v410, %v435
        %v444 = vsel %vm427, %v414, %v436
        %v445 = vsel %vm428, %v416, %v437
        %v446 = vsel %vm429, %v418, %v438
        %v447 = vsel %vm430, %v420, %v439
        %448 = vst [vmem:[%s259] sm:$0xff] %v440
        %449 = vst [vmem:[%s259 + $0x8] sm:$0xff] %v441
        %450 = vst [vmem:[%s259 + $0x10] sm:$0xff] %v442
        %451 = vst [vmem:[%s259 + $0x18] sm:$0xff] %v443
        %452 = vst [vmem:[%s259 + $0x20] sm:$0xff] %v444
        %453 = vst [vmem:[%s259 + $0x28] sm:$0xff] %v445
        %454 = vst [vmem:[%s259 + $0x30] sm:$0xff] %v446
        %455 = vst [vmem:[%s259 + $0x38] sm:$0xff] %v447
        %s456 = sand.u32 %s113, 1
        %s457 = sand.u32 %s113, 1
        %s458 = smul.addr %s457, 64
        %s459 = scalar_lea.vmem [#allocation4], %s458
        // Predicated region
        $region75: #{subpixel_conv_block.1} parent=69 // pred_check
          %p460 = pneg %p123
        $region76: #{subpixel_conv_block.1} parent=69 // pred_check_branch
          %462 = sbr.rel (%p460) target = $region78
        $region77: #{subpixel_conv_block.1} parent=69 // pred_region
          %s463 = smul.u32 2, %s16
          %s464 = smul.addr %s463, 8
          %s465 = scalar_lea.vmem %s4, %s464
          // Predicated region
          $region79: #{subpixel_conv_block.1} parent=77 // pred_check
            _
          $region80: #{subpixel_conv_block.1} parent=77 // pred_check_branch
            %467 = sbr.rel (0) target = $region82
          $region81: #{subpixel_conv_block.1} parent=77 // pred_region
            // Predicated region
            $region83: #{subpixel_conv_block.1} parent=81 // pred_check
              _
            $region84: #{subpixel_conv_block.1} parent=81 // pred_check_branch
              %469 = sbr.rel (0) target = $region86
            $region85: #{subpixel_conv_block.1} parent=81 // pred_region
              loop: start=0, step=1, limit=1
              $region87: #{subpixel_conv_block.1} parent=85 // loop_pre_header
                _
              $region88: #{subpixel_conv_block.1} parent=85 // loop_header
                %s471 = sphi 0, %s475
                %p472 = scmp.ge.s32.totalorder %s471, 1
                %s476 = sphi %s459, %s459
                %s477 = sphi %s465, %s465
              $region89: #{subpixel_conv_block.1} parent=85 // loop_header_branch
                %474 = sbr.rel (%p472) target = $region93
              $region90: #{subpixel_conv_block.1} parent=85 // loop_body
                %v478 = vld [vmem:[%s476] sm:$0xff]
                %479 = vst [vmem:[%s477] sm:$0xff] %v478
                %v480 = vld [vmem:[%s476 + $0x8] sm:$0xff]
                %481 = vst [vmem:[%s477 + $0x8] sm:$0xff] %v480
                %v482 = vld [vmem:[%s476 + $0x10] sm:$0xff]
                %483 = vst [vmem:[%s477 + $0x20] sm:$0xff] %v482
                %v484 = vld [vmem:[%s476 + $0x18] sm:$0xff]
                %485 = vst [vmem:[%s477 + $0x28] sm:$0xff] %v484
                %v486 = vld [vmem:[%s476 + $0x20] sm:$0xff]
                %487 = vst [vmem:[%s477 + $0x40] sm:$0xff] %v486
                %v488 = vld [vmem:[%s476 + $0x28] sm:$0xff]
                %489 = vst [vmem:[%s477 + $0x48] sm:$0xff] %v488
                %v490 = vld [vmem:[%s476 + $0x30] sm:$0xff]
                %491 = vst [vmem:[%s477 + $0x60] sm:$0xff] %v490
                %v492 = vld [vmem:[%s476 + $0x38] sm:$0xff]
                %493 = vst [vmem:[%s477 + $0x68] sm:$0xff] %v492
              $region91: #{subpixel_conv_block.1} parent=85 // loop_footer
                %s475 = sadd.s32 1, %s471
              $region92: #{subpixel_conv_block.1} parent=85 // loop_footer_branch
                %470 = sbr.rel target = $region88
              $region93: #{subpixel_conv_block.1} parent=85 // loop_exit
                _
            $region86: #{subpixel_conv_block.1} parent=81 // pred_fallthru
              _
            // Predicated region
            $region94: #{subpixel_conv_block.1} parent=81 // pred_check
              _
            $region95: #{subpixel_conv_block.1} parent=81 // pred_check_branch
              %495 = sbr.rel target = $region97
            $region96: #{subpixel_conv_block.1} parent=81 // pred_region
              _
            $region97: #{subpixel_conv_block.1} parent=81 // pred_fallthru
              _
          $region82: #{subpixel_conv_block.1} parent=77 // pred_fallthru
            _
          %496 = vnop
        $region78: #{subpixel_conv_block.1} parent=69 // pred_fallthru
          _
      $region70: #{subpixel_conv_block.1} parent=5 // pred_fallthru
        _
      %p497 = scmp.le.s32.totalorder 2, %s11
      // Predicated region
      $region98: #{subpixel_conv_block.1} parent=5 // pred_check
        %p498 = pneg %p497
      $region99: #{subpixel_conv_block.1} parent=5 // pred_check_branch
        %500 = sbr.rel (%p498) target = $region101
      $region100: #{subpixel_conv_block.1} parent=5 // pred_region
        %s501 = ssub.s32 %s11, 2
        // Predicated region
        $region102: #{subpixel_conv_block.1} parent=100 // pred_check
          %p502 = pneg %p129
        $region103: #{subpixel_conv_block.1} parent=100 // pred_check_branch
          %504 = sbr.rel (%p502) target = $region105
        $region104: #{subpixel_conv_block.1} parent=100 // pred_region
          %s505 = sand.u32 %s114, 1
          %s506 = sand.u32 %s114, 1
          %s507 = smul.addr %s506, 64
          %s508 = scalar_lea.vmem [#allocation4], %s507
        $region105: #{subpixel_conv_block.1} parent=100 // pred_fallthru
          _
      $region101: #{subpixel_conv_block.1} parent=5 // pred_fallthru
        _
    $region6: #{subpixel_conv_block.1} parent=1 // loop_footer
      %s15 = sadd.s32 1, %s11
    $region7: #{subpixel_conv_block.1} parent=1 // loop_footer_branch
      %10 = sbr.rel target = $region3
    $region8: #{subpixel_conv_block.1} parent=1 // loop_exit
      _

</llo_original>
